<compile_context>
chip_gen: v6e
topology: v6e:2x2x1
jax: 0.10.0
libtpu: 0.0.40
codegen_flags: <defaults>
</compile_context>

<pallas_src>
import jax
import jax.numpy as jnp
from jax.experimental import pallas as pl
from jax.experimental.pallas import tpu as pltpu


def _round_up(x: int, m: int) -> int:
    return (x + m - 1) // m * m


# Sublane packing factor per element size (sub-32-bit dtypes pack along sublanes).
_SUBLANE_PACK = {4: 8, 2: 16, 1: 32}


def _normalize_kernel(scale_ref, bias_ref, x_ref, o_ref):
    # scale_ref / bias_ref: full (C,) f32 vectors in SMEM.
    # x_ref / o_ref: (1, rows_per_block, LANE) VMEM tiles of channel c.
    c = pl.program_id(1)                      # channel is the SECOND grid axis
    s = scale_ref[c]
    b = bias_ref[c]
    o_ref[...] = (x_ref[...].astype(jnp.float32) * s + b).astype(o_ref.dtype)


def normalize_mean_scale(x, mean, scale, target, *,
                         target_block_bytes=4 * 1024 * 1024,
                         min_pallas_bytes=256 * 1024,
                         force_pallas=False):
    """x: (C, H, W); mean/scale: length-C sequences; target: passthrough."""
    C, H, W = x.shape
    HW = H * W
    mean = jnp.asarray(mean, jnp.float32)
    scale = jnp.asarray(scale, jnp.float32)
    bias = -mean * scale                      # out = x*scale + bias == (x - mean)*scale

    out_dtype = x.dtype if jnp.issubdtype(x.dtype, jnp.floating) else jnp.float32
    itemsize = jnp.dtype(x.dtype).itemsize

    # ---- Small-input fast path: kernel-launch + tiling overhead dominates. --
    if (C * HW * itemsize < min_pallas_bytes) and not force_pallas:
        out = (x.astype(jnp.float32) * scale[:, None, None]
               + bias[:, None, None]).astype(out_dtype)
        return out, target

    # ---- Lane-dense tiling of the flattened spatial axis ---------------------
    MAX_LANE = 1024
    lane = None
    for cand in range(128, min(MAX_LANE, HW) + 1, 128):
        if HW % cand == 0:
            lane = cand                       # largest multiple of 128 dividing HW
    if lane is not None:
        padded_hw = HW                        # reshape is a free view, no copy
    else:
        # Rare fallback (HW not a multiple of 128): minimal pad to one lane row.
        lane = min(MAX_LANE, _round_up(HW, 128))
        padded_hw = _round_up(HW, lane)

    n_rows = padded_hw // lane
    pack = _SUBLANE_PACK.get(itemsize, 8)

    # Rows per block: multiple of the dtype's sublane packing, capped so that
    # (a) a block stays ~target_block_bytes and (b) the grid has >= ~8 steps
    # total (DMA pipelining + v7x two-TensorCore balance on the leading axis).
    max_rows_vmem = max(pack, (target_block_bytes // (lane * itemsize)) // pack * pack)
    want_spatial_blocks = max(2, pl.cdiv(8, C))
    rows_depth = _round_up(pl.cdiv(n_rows, want_spatial_blocks), pack)
    rows_per_block = min(max_rows_vmem, rows_depth)
    if rows_per_block >= n_rows:
        rows_per_block = n_rows               # full dim -> always a legal block
    n_blocks = pl.cdiv(n_rows, rows_per_block)  # ragged last block masked by Pallas

    xf = x.reshape(C, HW)
    if padded_hw != HW:
        xf = jnp.pad(xf, ((0, 0), (0, padded_hw - HW)))
    x3 = xf.reshape(C, n_rows, lane)

    block = (1, rows_per_block, lane)
    out3 = pl.pallas_call(
        _normalize_kernel,
        out_shape=jax.ShapeDtypeStruct((C, n_rows, lane), out_dtype),
        grid=(n_blocks, C),                   # long spatial axis leads the grid
        in_specs=[
            pl.BlockSpec(memory_space=pltpu.MemorySpace.SMEM),   # scale (C,) f32
            pl.BlockSpec(memory_space=pltpu.MemorySpace.SMEM),   # bias  (C,) f32
            pl.BlockSpec(block, lambda b, c: (c, b, 0)),         # x tile
        ],
        out_specs=pl.BlockSpec(block, lambda b, c: (c, b, 0)),
        compiler_params=pltpu.CompilerParams(
            dimension_semantics=("parallel", "parallel"),
            # ~4 MiB blocks * (2 in + 2 out buffers) = 16 MiB: explicit 32 MiB
            # clears v5e's 16 MiB default and stays well inside v7x's 64 MiB/TC.
            vmem_limit_bytes=32 * 1024 * 1024,
        ),
    )(scale, bias, x3)

    if padded_hw != HW:
        out = out3.reshape(C, padded_hw)[:, :HW].reshape(C, H, W)
    else:
        out = out3.reshape(C, H, W)           # free view, no copy
    # The PyTorch module returns (normalized_tensor, target) with target unchanged.
    return out, target


if __name__ == "__main__":
    key = jax.random.PRNGKey(0)
    kx, kt, kx2 = jax.random.split(key, 3)

    # Deterministic per-channel "parameters" set in-script.
    mean = [0.485, 0.456, 0.406, 0.5]
    scale = [1.0 / 0.229, 1.0 / 0.224, 1.0 / 0.225, 2.0]

    def ref_fn(x):
        m = jnp.asarray(mean, jnp.float32)[:, None, None]
        s = jnp.asarray(scale, jnp.float32)[:, None, None]
        return (x - m) * s

    # 1) Pallas path, lane-aligned spatial size (free reshape view, no padding).
    C, H, W = 4, 64, 64
    x = jax.random.normal(kx, (C, H, W), dtype=jnp.float32)
    target = jax.random.randint(kt, (H, W), 0, 21, dtype=jnp.int32)  # seg labels
    out, tgt = normalize_mean_scale(x, mean, scale, target, force_pallas=True)
    out = jax.block_until_ready(out)
    assert out.shape == x.shape and out.dtype == x.dtype
    assert jnp.allclose(out, ref_fn(x), atol=1e-5), "Pallas (aligned) mismatch"
    assert (tgt == target).all(), "target must pass through unchanged"

    # 2) Pallas path, ragged spatial size (H*W % 128 != 0 -> minimal-pad fallback).
    x2 = jax.random.normal(kx2, (4, 20, 20), dtype=jnp.float32)
    out2, _ = normalize_mean_scale(x2, mean, scale, target, force_pallas=True)
    out2 = jax.block_until_ready(out2)
    assert jnp.allclose(out2, ref_fn(x2), atol=1e-5), "Pallas (ragged) mismatch"

    # 3) Tiny-input fast path (plain XLA fusion, no kernel launch).
    x3 = x[:, :16, :16]
    out3, _ = normalize_mean_scale(x3, mean, scale, target[:16, :16])
    out3 = jax.block_until_ready(out3)
    assert jnp.allclose(out3, ref_fn(x3), atol=1e-5), "small-input fallback mismatch"

    print("KERNEL_OK")
</pallas_src>

<mosaic_0001>
module attributes {stable_mosaic.version = 11 : i64} {
  func.func @_normalize_kernel(%arg0: i32, %arg1: i32, %arg2: memref<4xf32, #tpu.memory_space<smem>>, %arg3: memref<4xf32, #tpu.memory_space<smem>>, %arg4: memref<1x4x1024xf32, #tpu.memory_space<vmem>>, %arg5: memref<1x4x1024xf32, #tpu.memory_space<vmem>>) attributes {dimension_semantics = [#tpu.dimension_semantics<parallel>, #tpu.dimension_semantics<parallel>], iteration_bounds = array<i64: 1, 4>, scalar_prefetch = 0 : i64, scratch_operands = 0 : i64, tpu.core_type = #tpu.core_type<tc>, window_params = [{transform_indices = @transform_0, window_bounds = array<i64: 4>}, {transform_indices = @transform_1, window_bounds = array<i64: 4>}, {transform_indices = @transform_2, window_bounds = array<i64: 1, 4, 1024>}, {transform_indices = @transform_3, window_bounds = array<i64: 1, 4, 1024>}]} {
    %0 = arith.index_cast %arg1 : i32 to index
    %1 = memref.load %arg2[%0] : memref<4xf32, #tpu.memory_space<smem>>
    %2 = arith.index_cast %arg1 : i32 to index
    %3 = memref.load %arg3[%2] : memref<4xf32, #tpu.memory_space<smem>>
    %c0 = arith.constant 0 : index
    %c0_0 = arith.constant 0 : index
    %c0_1 = arith.constant 0 : index
    %4 = vector.load %arg4[%c0, %c0_0, %c0_1] : memref<1x4x1024xf32, #tpu.memory_space<vmem>>, vector<1x4x1024xf32>
    %5 = vector.broadcast %1 : f32 to vector<1x4x1024xf32>
    %6 = arith.mulf %4, %5 : vector<1x4x1024xf32>
    %7 = vector.broadcast %3 : f32 to vector<1x4x1024xf32>
    %8 = arith.addf %6, %7 : vector<1x4x1024xf32>
    %c0_2 = arith.constant 0 : index
    %c0_3 = arith.constant 0 : index
    %c0_4 = arith.constant 0 : index
    %9 = vector.load %arg5[%c0_2, %c0_3, %c0_4] : memref<1x4x1024xf32, #tpu.memory_space<vmem>>, vector<1x4x1024xf32>
    tpu.vector_store %arg5[%c0_2, %c0_3, %c0_4], %8 {strides = array<i32>} : memref<1x4x1024xf32, #tpu.memory_space<vmem>>, vector<1x4x1024xf32>,
    return
  }
  func.func @transform_0(%arg0: i32, %arg1: i32) -> i32 {
    %c0_i32 = arith.constant 0 : i32
    %c0_i32_0 = arith.constant 0 : i32
    return %c0_i32 : i32
  }
  func.func @transform_1(%arg0: i32, %arg1: i32) -> i32 {
    %c0_i32 = arith.constant 0 : i32
    %c0_i32_0 = arith.constant 0 : i32
    return %c0_i32 : i32
  }
  func.func @transform_2(%arg0: i32, %arg1: i32) -> (i32, i32, i32) {
    %c0_i32 = arith.constant 0 : i32
    %c0_i32_0 = arith.constant 0 : i32
    return %arg1, %arg0, %c0_i32 : i32, i32, i32
  }
  func.func @transform_3(%arg0: i32, %arg1: i32) -> (i32, i32, i32) {
    %c0_i32 = arith.constant 0 : i32
    %c0_i32_0 = arith.constant 0 : i32
    return %arg1, %arg0, %c0_i32 : i32, i32, i32
  }
}

</mosaic_0001>

<llo_original>
// kernel: tpu_custom_call.1
$region0: #{tpu_custom_call.1}
  #allocation0 [shape = 'u32[]', space=smem, size = 0x4, offset = 0x4, fixed_abs, tag = 'smem constant byte address 0x4 - core index']
  #allocation1 [shape = 'u32[144,128]{1,0:T(1,128)}', space=vmem, size = 0x12000, scoped, tag = 'internal scratch']
  %s0 = inlined_call_operand.hbm [shape: f32[4], index: 0, kind: input, shape index: {}]
  %s1 = inlined_call_operand.vmem [shape: f32[4], index: 1, kind: input, shape index: {}]
  %s2 = inlined_call_operand.hbm [shape: f32[4,4,1024], index: 2, kind: input, shape index: {}]
  %s3 = inlined_call_operand.hbm [shape: f32[4,4,1024], index: 3, kind: output, shape index: {}]
  %s4 = sld [smem:[#allocation0]]
  $region57: #{tpu_custom_call.1} parent=0
    _
  %s6 = ssub.s32 1, %s4
  %s7 = scalar_select 0, %s6, %s4
  $region1: #{tpu_custom_call.1} parent=0
    #allocation2 [shape = 'u8[512]{0}', space=smem, size = 0x200, scoped, tag = 'input window, operand 0, single buffered']
    #allocation3 [shape = 's32[2]{0}', space=sflag, size = 0x8, scoped, tag = 'scoped memory for tpu_custom_call.1']
    #allocation4 [shape = 's32[2]{0}', space=sflag, size = 0x8, scoped, tag = 'scoped memory for tpu_custom_call.1']
    #allocation5 [shape = 's32[2]{0}', space=sflag, size = 0x8, scoped, tag = 'scoped memory for tpu_custom_call.1']
    #allocation6 [shape = 's32[2]{0}', space=sflag, size = 0x8, scoped, tag = 'scoped memory for tpu_custom_call.1']
    #allocation7 [shape = 'u8[512]{0}', space=smem, size = 0x200, scoped, tag = 'input window, operand 1, single buffered']
    #allocation8 [shape = 'u8[32768]{0}', space=vmem, size = 0x8000, scoped, tag = 'input window, operand 2']
    #allocation9 [shape = 'u8[32768]{0}', space=vmem, size = 0x8000, scoped, tag = 'output window, operand 0']
    %8 = vsyncpa [#allocation5], 0
    %9 = vsyncpa [#allocation6], 0
    %10 = vsyncpa [#allocation3], 0
    %s11 = scalar_lea.sflag [#allocation3], 1
    %12 = vsyncpa %s11, 0
    %13 = vsyncpa [#allocation4], 0
    %s14 = scalar_lea.sflag [#allocation4], 1
    %15 = vsyncpa %s14, 0
    loop: start=0, step=1, limit=6
    $region2: #{tpu_custom_call.1} parent=1 // loop_pre_header
      _
    $region3: #{tpu_custom_call.1} parent=1 // loop_header
      %s17 = sphi 0, %s21
      %p18 = scmp.ge.s32.totalorder %s17, 6
      %s24 = sphi 0, %s36
      %s25 = sphi 0, %s32
      %s26 = sphi 0, %s24
      %s27 = sphi 0, %s25
      %s28 = sphi 0, %s26
      %s29 = sphi 0, %s27
      %s37 = sphi 0, %s37
      %s39 = sphi 0, %s37
      %s40 = sphi 0, %s39
      %s54 = sphi 0, %s40
      %s58 = sphi 0, %s58
      %s60 = sphi 0, %s58
      %s61 = sphi 0, %s60
      %s75 = sphi 0, %s61
      %s83 = sphi 0, %s85
      %s86 = sphi 0, %s83
      %s87 = sphi 0, %s86
      %s103 = sphi 0, %s87
      %s111 = sphi 0, %s113
      %s114 = sphi 0, %s111
      %s115 = sphi 0, %s114
      %s131 = sphi 0, %s115
    $region4: #{tpu_custom_call.1} parent=1 // loop_header_branch
      %20 = sbr.rel (%p18) target = $region8
    $region5: #{tpu_custom_call.1} parent=1 // loop_body
      %s22 = ssub.s32 %s17, 1
      %s23 = ssub.s32 %s17, 2
      %s30 = sadd.s32 1, %s25
      %p31 = scmp.ge.s32.totalorder %s30, 4
      %s32 = scalar_select %p31, 0, %s30
      %s33 = sadd.s32 1, %s24
      %s34 = scalar_select %p31, %s33, %s24
      %p35 = scmp.ge.s32.totalorder %s34, 1
      %s36 = scalar_select %p35, 0, %s34
      %s38 = sadd.s32 %s37, 1
      %p41 = scmp.eq.s32.totalorder %s17, 3
      %p42 = scmp.ne.s32.totalorder %s37, %s39
      %p43 = scmp.eq.s32.totalorder %s17, 0
      %p44 = por %p42, %p43
      %p45 = scmp.ne.s32.totalorder %s37, %s39
      %p46 = scmp.eq.s32.totalorder %s22, 3
      %p47 = por %p45, %p46
      %p48 = scmp.ne.s32.totalorder %s39, %s40
      %p49 = scmp.eq.s32.totalorder %s22, 0
      %p50 = por %p48, %p49
      %p51 = scmp.ne.s32.totalorder %s39, %s40
      %p52 = scmp.eq.s32.totalorder %s23, 3
      %p53 = por %p51, %p52
      %p55 = scmp.ne.s32.totalorder %s40, %s54
      %p56 = scmp.eq.s32.totalorder %s23, 0
      %p57 = por %p55, %p56
      %s59 = sadd.s32 %s58, 1
      %p62 = scmp.eq.s32.totalorder %s17, 3
      %p63 = scmp.ne.s32.totalorder %s58, %s60
      %p64 = scmp.eq.s32.totalorder %s17, 0
      %p65 = por %p63, %p64
      %p66 = scmp.ne.s32.totalorder %s58, %s60
      %p67 = scmp.eq.s32.totalorder %s22, 3
      %p68 = por %p66, %p67
      %p69 = scmp.ne.s32.totalorder %s60, %s61
      %p70 = scmp.eq.s32.totalorder %s22, 0
      %p71 = por %p69, %p70
      %p72 = scmp.ne.s32.totalorder %s60, %s61
      %p73 = scmp.eq.s32.totalorder %s23, 3
      %p74 = por %p72, %p73
      %p76 = scmp.ne.s32.totalorder %s61, %s75
      %p77 = scmp.eq.s32.totalorder %s23, 0
      %p78 = por %p76, %p77
      %s79 = ssub.s32 %s25, %s32
      %s80 = ssub.s32 %s24, %s36
      %s81 = sor.u32 %s79, %s80
      %p82 = scmp.eq.s32.totalorder %s81, 0
      %s84 = sadd.s32 %s83, 1
      %s85 = scalar_select %p82, %s83, %s84
      %p88 = pneg %p82
      %p89 = scmp.eq.s32.totalorder %s17, 3
      %p90 = por %p88, %p89
      %p91 = scmp.ne.s32.totalorder %s83, %s86
      %p92 = scmp.eq.s32.totalorder %s17, 0
      %p93 = por %p91, %p92
      %p94 = scmp.ne.s32.totalorder %s83, %s86
      %p95 = scmp.eq.s32.totalorder %s22, 3
      %p96 = por %p94, %p95
      %p97 = scmp.ne.s32.totalorder %s86, %s87
      %p98 = scmp.eq.s32.totalorder %s22, 0
      %p99 = por %p97, %p98
      %p100 = scmp.ne.s32.totalorder %s86, %s87
      %p101 = scmp.eq.s32.totalorder %s23, 3
      %p102 = por %p100, %p101
      %p104 = scmp.ne.s32.totalorder %s87, %s103
      %p105 = scmp.eq.s32.totalorder %s23, 0
      %p106 = por %p104, %p105
      %s107 = ssub.s32 %s25, %s32
      %s108 = ssub.s32 %s24, %s36
      %s109 = sor.u32 %s107, %s108
      %p110 = scmp.eq.s32.totalorder %s109, 0
      %s112 = sadd.s32 %s111, 1
      %s113 = scalar_select %p110, %s111, %s112
      %p116 = pneg %p110
      %p117 = scmp.eq.s32.totalorder %s17, 3
      %p118 = por %p116, %p117
      %p119 = scmp.ne.s32.totalorder %s111, %s114
      %p120 = scmp.eq.s32.totalorder %s17, 0
      %p121 = por %p119, %p120
      %p122 = scmp.ne.s32.totalorder %s111, %s114
      %p123 = scmp.eq.s32.totalorder %s22, 3
      %p124 = por %p122, %p123
      %p125 = scmp.ne.s32.totalorder %s114, %s115
      %p126 = scmp.eq.s32.totalorder %s22, 0
      %p127 = por %p125, %p126
      %p128 = scmp.ne.s32.totalorder %s114, %s115
      %p129 = scmp.eq.s32.totalorder %s23, 3
      %p130 = por %p128, %p129
      %p132 = scmp.ne.s32.totalorder %s115, %s131
      %p133 = scmp.eq.s32.totalorder %s23, 0
      %p134 = por %p132, %p133
      %p135 = scmp.le.s32.totalorder 1, %s17
      %p136 = scmp.lt.s32.totalorder %s17, 5
      %p137 = pnand %p135, %p136
      %p138 = pneg %p137
      // Predicated region
      $region9: #{tpu_custom_call.1} parent=5 // pred_check
        _
      $region10: #{tpu_custom_call.1} parent=5 // pred_check_branch
        %140 = sbr.rel (%p137) target = $region12
      $region11: #{tpu_custom_call.1} parent=5 // pred_region
        %s141 = ssub.s32 %s17, 1
        // Predicated region
        $region13: #{tpu_custom_call.1} parent=11 // pred_check
          %p142 = pneg %p50
        $region14: #{tpu_custom_call.1} parent=11 // pred_check_branch
          %144 = sbr.rel (%p142) target = $region16
        $region15: #{tpu_custom_call.1} parent=11 // pred_region
          %s146 = ssub.s32 16, 16
          %147 = vsyncadd [#allocation5], %s146
          %150 = dma.hbm_to_smem %s0, 16, [#allocation2], [#allocation5]
        $region16: #{tpu_custom_call.1} parent=11 // pred_fallthru
          _
        // Predicated region
        $region17: #{tpu_custom_call.1} parent=11 // pred_check
          %p151 = pneg %p71
        $region18: #{tpu_custom_call.1} parent=11 // pred_check_branch
          %153 = sbr.rel (%p151) target = $region20
        $region19: #{tpu_custom_call.1} parent=11 // pred_region
          %s155 = ssub.s32 16, 16
          %156 = vsyncadd [#allocation6], %s155
          %s158 = sshll.u32 %s1, 4
          %s159 = int_to_ptr.vmem [resolvable:$true] %s158
          %161 = dma.vmem_to_smem %s159, 16, [#allocation7], [#allocation6]
        $region20: #{tpu_custom_call.1} parent=11 // pred_fallthru
          _
      $region12: #{tpu_custom_call.1} parent=5 // pred_fallthru
        _
      %p162 = scmp.lt.s32.totalorder %s17, 4
      // Predicated region
      $region21: #{tpu_custom_call.1} parent=5 // pred_check
        %p163 = pneg %p162
      $region22: #{tpu_custom_call.1} parent=5 // pred_check_branch
        %165 = sbr.rel (%p163) target = $region24
      $region23: #{tpu_custom_call.1} parent=5 // pred_region
        // Predicated region
        $region25: #{tpu_custom_call.1} parent=23 // pred_check
          %p166 = pneg %p93
        $region26: #{tpu_custom_call.1} parent=23 // pred_check_branch
          %168 = sbr.rel (%p166) target = $region28
        $region27: #{tpu_custom_call.1} parent=23 // pred_region
          %s169 = sand.u32 %s83, 1
          %s170 = scalar_lea.sflag [#allocation3], %s169
          %s171 = sand.u32 %s83, 1
          %s172 = smul.addr %s171, 32
          %s173 = scalar_lea.vmem [#allocation8], %s172
          %s175 = ssub.s32 512, 512
          %176 = vsyncadd %s170, %s175
          %s177 = smul.addr %s24, 8
          %s178 = smul.addr %s25, 8
          %s179 = sadd.s32 %s177, %s178
          %s180 = smul.addr %s179, 64
          %s181 = scalar_lea.hbm %s2, %s180
          %s183 = sshll.u32 %s173, 4
          %s184 = int_to_ptr.vmem [resolvable:$true] %s183
          %186 = dma.hbm_to_vmem [thread:$0]  %s181, 512, %s184, %s170
        $region28: #{tpu_custom_call.1} parent=23 // pred_fallthru
          _
      $region24: #{tpu_custom_call.1} parent=5 // pred_fallthru
        _
      %p187 = scmp.le.s32.totalorder 1, %s17
      %p188 = scmp.lt.s32.totalorder %s17, 5
      %p189 = pnand %p187, %p188
      %p190 = pneg %p189
      // Predicated region
      $region29: #{tpu_custom_call.1} parent=5 // pred_check
        _
      $region30: #{tpu_custom_call.1} parent=5 // pred_check_branch
        %192 = sbr.rel (%p189) target = $region32
      $region31: #{tpu_custom_call.1} parent=5 // pred_region
        %s193 = ssub.s32 %s17, 1
        // Predicated region
        $region33: #{tpu_custom_call.1} parent=31 // pred_check
          %p194 = pneg %p50
        $region34: #{tpu_custom_call.1} parent=31 // pred_check_branch
          %196 = sbr.rel (%p194) target = $region36
        $region35: #{tpu_custom_call.1} parent=31 // pred_region
          %197 = dma.done [#allocation5], 16
        $region36: #{tpu_custom_call.1} parent=31 // pred_fallthru
          _
        // Predicated region
        $region37: #{tpu_custom_call.1} parent=31 // pred_check
          %p198 = pneg %p71
        $region38: #{tpu_custom_call.1} parent=31 // pred_check_branch
          %200 = sbr.rel (%p198) target = $region40
        $region39: #{tpu_custom_call.1} parent=31 // pred_region
          %201 = dma.done [#allocation6], 16
        $region40: #{tpu_custom_call.1} parent=31 // pred_fallthru
          _
        %s202 = sand.u32 %s86, 1
        %s203 = scalar_lea.sflag [#allocation3], %s202
        %s204 = sand.u32 %s86, 1
        %s205 = smul.addr %s204, 32
        %s206 = scalar_lea.vmem [#allocation8], %s205
        // Predicated region
        $region41: #{tpu_custom_call.1} parent=31 // pred_check
          %p207 = pneg %p99
        $region42: #{tpu_custom_call.1} parent=31 // pred_check_branch
          %209 = sbr.rel (%p207) target = $region44
        $region43: #{tpu_custom_call.1} parent=31 // pred_region
          %210 = dma.done %s203, 512
        $region44: #{tpu_custom_call.1} parent=31 // pred_fallthru
          _
        %211 = sfence
        %p212 = pneg %p50
        %p213 = pneg %p47
        %p214 = pneg %p71
        %p215 = pneg %p68
        %s216 = sand.u32 %s86, 1
        %s217 = scalar_lea.sflag [#allocation3], %s216
        %s218 = sand.u32 %s86, 1
        %s219 = smul.addr %s218, 32
        %s220 = scalar_lea.vmem [#allocation8], %s219
        %p221 = pneg %p99
        %p222 = pneg %p96
        %p223 = pneg %p127
        %p224 = pneg %p124
        %s225 = sand.u32 %s114, 1
        %s226 = scalar_lea.sflag [#allocation4], %s225
        %s227 = sand.u32 %s114, 1
        %s228 = smul.addr %s227, 32
        %s229 = scalar_lea.vmem [#allocation9], %s228
        %s230 = sld [smem:[#allocation2 + %s27]]
        %s231 = sld [smem:[#allocation7 + %s27]]
        %v232 = vld [vmem:[%s206] sm:$0xff]
        %v233 = vld [vmem:[%s206 + $0x8] sm:$0xff]
        %v234 = vld [vmem:[%s206 + $0x10] sm:$0xff]
        %v235 = vld [vmem:[%s206 + $0x18] sm:$0xff]
        %v236 = vstv %s230
        %v237 = vmul.f32 %v232, %v236
        %v238 = vmul.f32 %v233, %v236
        %v239 = vmul.f32 %v234, %v236
        %v240 = vmul.f32 %v235, %v236
        %v241 = vstv %s231
        %v242 = vadd.f32 %v237, %v241
        %v243 = vadd.f32 %v238, %v241
        %v244 = vadd.f32 %v239, %v241
        %v245 = vadd.f32 %v240, %v241
        %246 = vst [vmem:[%s229] sm:$0xff] %v242
        %247 = vst [vmem:[%s229 + $0x8] sm:$0xff] %v243
        %248 = vst [vmem:[%s229 + $0x10] sm:$0xff] %v244
        %249 = vst [vmem:[%s229 + $0x18] sm:$0xff] %v245
        %s250 = sand.u32 %s114, 1
        %s251 = scalar_lea.sflag [#allocation4], %s250
        %s252 = sand.u32 %s114, 1
        %s253 = smul.addr %s252, 32
        %s254 = scalar_lea.vmem [#allocation9], %s253
        // Predicated region
        $region45: #{tpu_custom_call.1} parent=31 // pred_check
          %p255 = pneg %p124
        $region46: #{tpu_custom_call.1} parent=31 // pred_check_branch
          %257 = sbr.rel (%p255) target = $region48
        $region47: #{tpu_custom_call.1} parent=31 // pred_region
          %s259 = ssub.s32 512, 512
          %260 = vsyncadd %s251, %s259
          %s261 = smul.addr %s26, 8
          %s262 = smul.addr %s27, 8
          %s263 = sadd.s32 %s261, %s262
          %s264 = smul.addr %s263, 64
          %s265 = scalar_lea.hbm %s3, %s264
          %s267 = sshll.u32 %s254, 4
          %s268 = int_to_ptr.vmem [resolvable:$true] %s267
          %270 = dma.vmem_to_hbm [thread:$0]  %s268, 512, %s265, %s251
        $region48: #{tpu_custom_call.1} parent=31 // pred_fallthru
          _
      $region32: #{tpu_custom_call.1} parent=5 // pred_fallthru
        _
      %p271 = scmp.le.s32.totalorder 2, %s17
      // Predicated region
      $region49: #{tpu_custom_call.1} parent=5 // pred_check
        %p272 = pneg %p271
      $region50: #{tpu_custom_call.1} parent=5 // pred_check_branch
        %274 = sbr.rel (%p272) target = $region52
      $region51: #{tpu_custom_call.1} parent=5 // pred_region
        %s275 = ssub.s32 %s17, 2
        // Predicated region
        $region53: #{tpu_custom_call.1} parent=51 // pred_check
          %p276 = pneg %p130
        $region54: #{tpu_custom_call.1} parent=51 // pred_check_branch
          %278 = sbr.rel (%p276) target = $region56
        $region55: #{tpu_custom_call.1} parent=51 // pred_region
          %s279 = sand.u32 %s115, 1
          %s280 = scalar_lea.sflag [#allocation4], %s279
          %s281 = sand.u32 %s115, 1
          %s282 = smul.addr %s281, 32
          %s283 = scalar_lea.vmem [#allocation9], %s282
          %284 = dma.done %s280, 512
        $region56: #{tpu_custom_call.1} parent=51 // pred_fallthru
          _
      $region52: #{tpu_custom_call.1} parent=5 // pred_fallthru
        _
    $region6: #{tpu_custom_call.1} parent=1 // loop_footer
      %s21 = sadd.s32 1, %s17
    $region7: #{tpu_custom_call.1} parent=1 // loop_footer_branch
      %16 = sbr.rel target = $region3
    $region8: #{tpu_custom_call.1} parent=1 // loop_exit
      _
    %285 = vsyncpa [#allocation3], 1
    %s286 = scalar_lea.sflag [#allocation3], 1
    %287 = vsyncpa %s286, 1
    %288 = vsyncpa [#allocation4], 1
    %s289 = scalar_lea.sflag [#allocation4], 1
    %290 = vsyncpa %s289, 1
    %291 = vsyncpa [#allocation5], 1
    %s292 = scalar_lea.sflag [#allocation5], 1
    %293 = vsyncpa %s292, 1
    %294 = vsyncpa [#allocation6], 1
    %s295 = scalar_lea.sflag [#allocation6], 1
    %296 = vsyncpa %s295, 1

</llo_original>
